<compile_context>
chip_gen: v7x
topology: tpu7x:2x2x1
jax: 0.10.0
libtpu: 0.0.40
codegen_flags: <defaults>
</compile_context>

<pallas_src>
from functools import partial

import jax
import jax.numpy as jnp
from jax import lax
from jax.experimental import pallas as pl
from jax.experimental.pallas import tpu as pltpu


# ----------------------------- schedule (glue) ------------------------------

def cosine_schedule(timesteps, s=0.008):
    steps = timesteps + 1
    x = jnp.linspace(0.0, float(steps), steps)
    alphas_cumprod = jnp.cos((x / steps + s) / (1.0 + s) * jnp.pi * 0.5) ** 2
    alphas_cumprod = alphas_cumprod / alphas_cumprod[0]
    alphas = alphas_cumprod[1:] / alphas_cumprod[:-1]
    return jnp.clip(alphas, 0.001, 1.0)


# ------------------------------ Pallas kernel -------------------------------

def _diffusion_loss_kernel(coef_ref,     # SMEM (2,)        f32 [sqrt_ac[t], sqrt_1m_ac[t]]
                           x0_ref,       # VMEM (B, C, tN)  f32 x_0 tile (all batch)
                           noise_ref,    # VMEM (C, tN)     f32 noise[t] tile (shared over batch)
                           w1t_ref,      # VMEM (Hd, C)     bf16 W1^T
                           b1_ref,       # VMEM (Hd, 1)     f32 b1 + temb[t]
                           w2t_ref,      # VMEM (C, Hd)     bf16 W2^T
                           b2_ref,       # VMEM (C, 1)      f32
                           part_ref,     # VMEM (B, C, Pw)  f32 per-tile partial |err| sums
                           *, hw, tile_n, part_w, need_mask):
    j = pl.program_id(0)                 # pixel-tile index (parallel axis)

    c0 = coef_ref[0]
    c1 = coef_ref[1]

    noise = noise_ref[...]               # (C, tN) f32
    x0 = x0_ref[...]                     # (B, C, tN) f32
    batch = x0.shape[0]
    groups = tile_n // part_w

    if need_mask:
        lane = lax.broadcasted_iota(jnp.int32, (1, tile_n), 1)
        valid = (j * tile_n + lane) < hw                      # mask padded tail lanes

    for b in range(batch):                                    # static unroll, B is small
        # q_sample: alpha interpolation (VPU, f32, lane-dense)
        xb = c0 * x0[b] + c1 * noise                          # (C, tN)

        # model: pointwise MLP; bf16 operands on the MXU, f32 accumulation
        h = jnp.dot(w1t_ref[...], xb.astype(jnp.bfloat16),
                    preferred_element_type=jnp.float32)       # (Hd, tN)
        h = jnp.maximum(h + b1_ref[...], 0.0)
        pred = jnp.dot(w2t_ref[...], h.astype(jnp.bfloat16),
                       preferred_element_type=jnp.float32)    # (C, tN)
        pred = pred + b2_ref[...]

        err = jnp.abs(noise - pred)                           # (C, tN) f32
        if need_mask:
            err = jnp.where(valid, err, 0.0)

        # VPU-only reduction: fold 128-lane groups onto each other (aligned
        # lane slices are free vreg selects; no XLU cross-lane reduce here).
        part = err[:, 0:part_w]
        for g in range(1, groups):
            part = part + err[:, g * part_w:(g + 1) * part_w]
        part_ref[b, :, :] = part


# ------------------------------ tiling helpers ------------------------------

_MAX_TILE_N = 32768                      # lane cap (v5e/v6e can afford big tiles)
_TILE_VMEM_BUDGET = 24 << 20             # per-tile working-set budget (safe on v7x)


def _per_lane_bytes(B, C, Hd):
    # Per 128-lane column of one pixel tile:
    #   inputs, double-buffered: 2 * 4B * (B*C for x_0  +  C for noise)
    #   intermediates (f32 + bf16 copies, per batch, generous):
    #     x_noisy C*(4+2), h Hd*(4+2), pred/err C*(4+4)
    return 8 * (B * C + C) + B * (6 * Hd + 14 * C) + 64


def _pick_tile_n(hw, B, C, Hd):
    per_lane = _per_lane_bytes(B, C, Hd)
    hw_pad = ((hw + 127) // 128) * 128
    tile = 128
    while (tile * 2 <= min(hw_pad, _MAX_TILE_N)
           and tile * 2 * per_lane <= _TILE_VMEM_BUDGET):
        tile *= 2
    if tile >= hw:
        return hw                        # single full-width block (always legal)
    return tile


def _vmem_limit_bytes(tile_n, B, C, Hd):
    est = _per_lane_bytes(B, C, Hd) * tile_n + (2 << 20)
    return int(min(32 << 20, max(4 << 20, est)))


# --------------------------------- wrapper ----------------------------------

def diffusion_forward(x_0, noise, t, params, schedule):
    """x_0: (B, C, H, W) NCHW; noise: (T, C, H, W); t: (1,) int32."""
    B, C, H, W = x_0.shape
    HW = H * W
    sqrt_ac, sqrt_1m_ac = schedule
    w1, b1, temb_table, w2, b2 = params
    Hd = w1.shape[1]

    t0 = t[0]
    coefs = jnp.stack([sqrt_ac[t0], sqrt_1m_ac[t0]]).astype(jnp.float32)

    # NCHW -> (B, C, H*W): pure reshape (no transpose pass over HBM).
    x0_f = x_0.reshape(B, C, HW).astype(jnp.float32)
    # single noise slab noise[t]: (C, H*W); batch broadcast happens in-kernel.
    nz_f = noise[t0].reshape(C, HW).astype(jnp.float32)

    # Weights transposed (N stays on the lane axis) and cast to bf16 for MXU.
    w1t = jnp.transpose(w1).astype(jnp.bfloat16)                      # (Hd, C)
    w2t = jnp.transpose(w2).astype(jnp.bfloat16)                      # (C, Hd)
    bias1 = (b1.reshape(Hd) + temb_table[t0]).reshape(Hd, 1).astype(jnp.float32)
    bias2 = b2.reshape(C, 1).astype(jnp.float32)

    tile_n = _pick_tile_n(HW, B, C, Hd)
    num_j = pl.cdiv(HW, tile_n)
    need_mask = (HW % tile_n) != 0
    part_w = 128 if tile_n % 128 == 0 else tile_n

    zero2 = lambda j: (0, 0)

    partials = pl.pallas_call(
        partial(_diffusion_loss_kernel,
                hw=HW, tile_n=tile_n, part_w=part_w, need_mask=need_mask),
        out_shape=jax.ShapeDtypeStruct((num_j, B, C, part_w), jnp.float32),
        grid=(num_j,),
        in_specs=[
            pl.BlockSpec(memory_space=pltpu.MemorySpace.SMEM),           # coefs
            pl.BlockSpec((B, C, tile_n), lambda j: (0, 0, j)),           # x_0
            pl.BlockSpec((C, tile_n), lambda j: (0, j)),                 # noise[t]
            pl.BlockSpec((Hd, C), zero2),                                # W1^T (bf16)
            pl.BlockSpec((Hd, 1), zero2),                                # b1+temb[t]
            pl.BlockSpec((C, Hd), zero2),                                # W2^T (bf16)
            pl.BlockSpec((C, 1), zero2),                                 # b2
        ],
        out_specs=pl.BlockSpec((None, B, C, part_w), lambda j: (j, 0, 0, 0)),
        compiler_params=pltpu.CompilerParams(
            dimension_semantics=("parallel",),                           # v7x megacore OK
            vmem_limit_bytes=_vmem_limit_bytes(tile_n, B, C, Hd)),
    )(coefs, x0_f, nz_f, w1t, bias1, w2t, bias2)

    # Tiny final reduction + mean normalization (lane-dense partials are small).
    return jnp.sum(partials) * (1.0 / float(B * C * HW))


# --------------------------------- driver ------------------------------------

if __name__ == "__main__":
    B, C, IMG, T, HID = 2, 4, 16, 16, 32

    # schedule coefficients (only the ones forward() actually needs)
    alphas = cosine_schedule(T)
    alpha_cumprod = jnp.cumprod(alphas)
    sqrt_alphas_cumprod = jnp.sqrt(alpha_cumprod)
    sqrt_one_minus_alphas_cumprod = jnp.sqrt(1.0 - alpha_cumprod)
    schedule = (sqrt_alphas_cumprod, sqrt_one_minus_alphas_cumprod)

    # deterministic synthetic model parameters
    key = jax.random.PRNGKey(0)
    k_x, k_n, k_t, k_w1, k_w2, k_e = jax.random.split(key, 6)
    w1 = 0.1 * jax.random.normal(k_w1, (C, HID), dtype=jnp.float32)
    b1 = jnp.zeros((1, HID), dtype=jnp.float32)
    temb_table = 0.1 * jax.random.normal(k_e, (T, HID), dtype=jnp.float32)
    w2 = 0.1 * jax.random.normal(k_w2, (HID, C), dtype=jnp.float32)
    b2 = jnp.zeros((1, C), dtype=jnp.float32)
    params = (w1, b1, temb_table, w2, b2)

    # forward() inputs
    x_0 = jax.random.normal(k_x, (B, C, IMG, IMG), dtype=jnp.float32)
    noise = jax.random.normal(k_n, (T, C, IMG, IMG), dtype=jnp.float32)
    t = jax.random.randint(k_t, (1,), 0, T, dtype=jnp.int32)

    # TODO(synk): the reference `forward` does `loss += ...` on an undefined
    # variable; implemented here as `loss = p_losses(...)`.
    loss = diffusion_forward(x_0, noise, t, params, schedule)
    jax.block_until_ready(loss)
    print("KERNEL_OK")
</pallas_src>

<mosaic_0001>
module attributes {stable_mosaic.version = 11 : i64} {
  func.func @_diffusion_loss_kernel(%arg0: i32, %arg1: memref<2xf32, #tpu.memory_space<smem>>, %arg2: memref<2x4x256xf32, #tpu.memory_space<vmem>>, %arg3: memref<4x256xf32, #tpu.memory_space<vmem>>, %arg4: memref<32x4xbf16, #tpu.memory_space<vmem>>, %arg5: memref<32x1xf32, #tpu.memory_space<vmem>>, %arg6: memref<4x32xbf16, #tpu.memory_space<vmem>>, %arg7: memref<4x1xf32, #tpu.memory_space<vmem>>, %arg8: memref<1x2x4x128xf32, #tpu.memory_space<vmem>>) attributes {dimension_semantics = [#tpu.dimension_semantics<parallel>], iteration_bounds = array<i64: 1>, scalar_prefetch = 0 : i64, scratch_operands = 0 : i64, tpu.core_type = #tpu.core_type<tc>, window_params = [{transform_indices = @transform_0, window_bounds = array<i64: 2>}, {transform_indices = @transform_1, window_bounds = array<i64: 2, 4, 256>}, {transform_indices = @transform_2, window_bounds = array<i64: 4, 256>}, {pipeline_mode = #tpu.pipeline_mode<synchronous>, transform_indices = @transform_3, window_bounds = array<i64: 32, 4>}, {pipeline_mode = #tpu.pipeline_mode<synchronous>, transform_indices = @transform_4, window_bounds = array<i64: 32, 1>}, {pipeline_mode = #tpu.pipeline_mode<synchronous>, transform_indices = @transform_5, window_bounds = array<i64: 4, 32>}, {pipeline_mode = #tpu.pipeline_mode<synchronous>, transform_indices = @transform_6, window_bounds = array<i64: 4, 1>}, {transform_indices = @transform_7, window_bounds = array<i64: 1, 2, 4, 128>}]} {
    %c0 = arith.constant 0 : index
    %0 = memref.load %arg1[%c0] : memref<2xf32, #tpu.memory_space<smem>>
    %c1 = arith.constant 1 : index
    %1 = memref.load %arg1[%c1] : memref<2xf32, #tpu.memory_space<smem>>
    %c0_0 = arith.constant 0 : index
    %c0_1 = arith.constant 0 : index
    %2 = vector.load %arg3[%c0_0, %c0_1] : memref<4x256xf32, #tpu.memory_space<vmem>>, vector<4x256xf32>
    %c0_2 = arith.constant 0 : index
    %c0_3 = arith.constant 0 : index
    %c0_4 = arith.constant 0 : index
    %3 = vector.load %arg2[%c0_2, %c0_3, %c0_4] : memref<2x4x256xf32, #tpu.memory_space<vmem>>, vector<2x4x256xf32>
    %4 = vector.extract_strided_slice %3 {offsets = [0, 0, 0], sizes = [1, 4, 256], strides = [1, 1, 1]} : vector<2x4x256xf32> to vector<1x4x256xf32>
    %5 = vector.shape_cast %4 : vector<1x4x256xf32> to vector<4x256xf32>
    %6 = vector.broadcast %0 : f32 to vector<4x256xf32>
    %7 = arith.mulf %6, %5 : vector<4x256xf32>
    %8 = vector.broadcast %1 : f32 to vector<4x256xf32>
    %9 = arith.mulf %8, %2 : vector<4x256xf32>
    %10 = arith.addf %7, %9 : vector<4x256xf32>
    %c0_5 = arith.constant 0 : index
    %c0_6 = arith.constant 0 : index
    %11 = vector.load %arg4[%c0_5, %c0_6] : memref<32x4xbf16, #tpu.memory_space<vmem>>, vector<32x4xbf16>
    %12 = arith.truncf %10 : vector<4x256xf32> to vector<4x256xbf16>
    %cst = arith.constant dense<0.000000e+00> : vector<32x256xf32>
    %13 = tpu.matmul %11, %12, %cst {dimension_numbers = #tpu.dot_dimension_numbers<[1], [0], [0], [1], [0, 0, 1, 1], [], []>} : vector<32x4xbf16>, vector<4x256xbf16>, vector<32x256xf32> -> vector<32x256xf32>
    %c0_7 = arith.constant 0 : index
    %c0_8 = arith.constant 0 : index
    %14 = vector.load %arg5[%c0_7, %c0_8] : memref<32x1xf32, #tpu.memory_space<vmem>>, vector<32x1xf32>
    %15 = vector.broadcast %14 : vector<32x1xf32> to vector<32x256xf32>
    %16 = arith.addf %13, %15 : vector<32x256xf32>
    %cst_9 = arith.constant 0.000000e+00 : f32
    %17 = vector.broadcast %cst_9 : f32 to vector<32x256xf32>
    %18 = arith.maximumf %16, %17 : vector<32x256xf32>
    %c0_10 = arith.constant 0 : index
    %c0_11 = arith.constant 0 : index
    %19 = vector.load %arg6[%c0_10, %c0_11] : memref<4x32xbf16, #tpu.memory_space<vmem>>, vector<4x32xbf16>
    %20 = arith.truncf %18 : vector<32x256xf32> to vector<32x256xbf16>
    %cst_12 = arith.constant dense<0.000000e+00> : vector<4x256xf32>
    %21 = tpu.matmul %19, %20, %cst_12 {dimension_numbers = #tpu.dot_dimension_numbers<[1], [0], [0], [1], [0, 0, 1, 1], [], []>} : vector<4x32xbf16>, vector<32x256xbf16>, vector<4x256xf32> -> vector<4x256xf32>
    %c0_13 = arith.constant 0 : index
    %c0_14 = arith.constant 0 : index
    %22 = vector.load %arg7[%c0_13, %c0_14] : memref<4x1xf32, #tpu.memory_space<vmem>>, vector<4x1xf32>
    %23 = vector.broadcast %22 : vector<4x1xf32> to vector<4x256xf32>
    %24 = arith.addf %21, %23 : vector<4x256xf32>
    %25 = arith.subf %2, %24 : vector<4x256xf32>
    %26 = math.absf %25 : vector<4x256xf32>
    %27 = vector.extract_strided_slice %26 {offsets = [0, 0], sizes = [4, 128], strides = [1, 1]} : vector<4x256xf32> to vector<4x128xf32>
    %28 = vector.extract_strided_slice %26 {offsets = [0, 128], sizes = [4, 128], strides = [1, 1]} : vector<4x256xf32> to vector<4x128xf32>
    %29 = arith.addf %27, %28 : vector<4x128xf32>
    %c0_15 = arith.constant 0 : index
    %c0_16 = arith.constant 0 : index
    %c0_17 = arith.constant 0 : index
    %c0_18 = arith.constant 0 : index
    %30 = vector.load %arg8[%c0_15, %c0_16, %c0_17, %c0_18] : memref<1x2x4x128xf32, #tpu.memory_space<vmem>>, vector<1x1x4x128xf32>
    %31 = vector.shape_cast %30 : vector<1x1x4x128xf32> to vector<4x128xf32>
    %32 = vector.shape_cast %29 : vector<4x128xf32> to vector<1x1x4x128xf32>
    tpu.vector_store %arg8[%c0_15, %c0_16, %c0_17, %c0_18], %32 {strides = array<i32>} : memref<1x2x4x128xf32, #tpu.memory_space<vmem>>, vector<1x1x4x128xf32>,
    %33 = vector.extract_strided_slice %3 {offsets = [1, 0, 0], sizes = [1, 4, 256], strides = [1, 1, 1]} : vector<2x4x256xf32> to vector<1x4x256xf32>
    %34 = vector.shape_cast %33 : vector<1x4x256xf32> to vector<4x256xf32>
    %35 = vector.broadcast %0 : f32 to vector<4x256xf32>
    %36 = arith.mulf %35, %34 : vector<4x256xf32>
    %37 = vector.broadcast %1 : f32 to vector<4x256xf32>
    %38 = arith.mulf %37, %2 : vector<4x256xf32>
    %39 = arith.addf %36, %38 : vector<4x256xf32>
    %c0_19 = arith.constant 0 : index
    %c0_20 = arith.constant 0 : index
    %40 = vector.load %arg4[%c0_19, %c0_20] : memref<32x4xbf16, #tpu.memory_space<vmem>>, vector<32x4xbf16>
    %41 = arith.truncf %39 : vector<4x256xf32> to vector<4x256xbf16>
    %cst_21 = arith.constant dense<0.000000e+00> : vector<32x256xf32>
    %42 = tpu.matmul %40, %41, %cst_21 {dimension_numbers = #tpu.dot_dimension_numbers<[1], [0], [0], [1], [0, 0, 1, 1], [], []>} : vector<32x4xbf16>, vector<4x256xbf16>, vector<32x256xf32> -> vector<32x256xf32>
    %c0_22 = arith.constant 0 : index
    %c0_23 = arith.constant 0 : index
    %43 = vector.load %arg5[%c0_22, %c0_23] : memref<32x1xf32, #tpu.memory_space<vmem>>, vector<32x1xf32>
    %44 = vector.broadcast %43 : vector<32x1xf32> to vector<32x256xf32>
    %45 = arith.addf %42, %44 : vector<32x256xf32>
    %cst_24 = arith.constant 0.000000e+00 : f32
    %46 = vector.broadcast %cst_24 : f32 to vector<32x256xf32>
    %47 = arith.maximumf %45, %46 : vector<32x256xf32>
    %c0_25 = arith.constant 0 : index
    %c0_26 = arith.constant 0 : index
    %48 = vector.load %arg6[%c0_25, %c0_26] : memref<4x32xbf16, #tpu.memory_space<vmem>>, vector<4x32xbf16>
    %49 = arith.truncf %47 : vector<32x256xf32> to vector<32x256xbf16>
    %cst_27 = arith.constant dense<0.000000e+00> : vector<4x256xf32>
    %50 = tpu.matmul %48, %49, %cst_27 {dimension_numbers = #tpu.dot_dimension_numbers<[1], [0], [0], [1], [0, 0, 1, 1], [], []>} : vector<4x32xbf16>, vector<32x256xbf16>, vector<4x256xf32> -> vector<4x256xf32>
    %c0_28 = arith.constant 0 : index
    %c0_29 = arith.constant 0 : index
    %51 = vector.load %arg7[%c0_28, %c0_29] : memref<4x1xf32, #tpu.memory_space<vmem>>, vector<4x1xf32>
    %52 = vector.broadcast %51 : vector<4x1xf32> to vector<4x256xf32>
    %53 = arith.addf %50, %52 : vector<4x256xf32>
    %54 = arith.subf %2, %53 : vector<4x256xf32>
    %55 = math.absf %54 : vector<4x256xf32>
    %56 = vector.extract_strided_slice %55 {offsets = [0, 0], sizes = [4, 128], strides = [1, 1]} : vector<4x256xf32> to vector<4x128xf32>
    %57 = vector.extract_strided_slice %55 {offsets = [0, 128], sizes = [4, 128], strides = [1, 1]} : vector<4x256xf32> to vector<4x128xf32>
    %58 = arith.addf %56, %57 : vector<4x128xf32>
    %c0_30 = arith.constant 0 : index
    %c1_31 = arith.constant 1 : index
    %c0_32 = arith.constant 0 : index
    %c0_33 = arith.constant 0 : index
    %59 = vector.load %arg8[%c0_30, %c1_31, %c0_32, %c0_33] : memref<1x2x4x128xf32, #tpu.memory_space<vmem>>, vector<1x1x4x128xf32>
    %60 = vector.shape_cast %59 : vector<1x1x4x128xf32> to vector<4x128xf32>
    %61 = vector.shape_cast %58 : vector<4x128xf32> to vector<1x1x4x128xf32>
    tpu.vector_store %arg8[%c0_30, %c1_31, %c0_32, %c0_33], %61 {strides = array<i32>} : memref<1x2x4x128xf32, #tpu.memory_space<vmem>>, vector<1x1x4x128xf32>,
    return
  }
  func.func @transform_0(%arg0: i32) -> i32 {
    %c0_i32 = arith.constant 0 : i32
    %c0_i32_0 = arith.constant 0 : i32
    return %c0_i32 : i32
  }
  func.func @transform_1(%arg0: i32) -> (i32, i32, i32) {
    %c0_i32 = arith.constant 0 : i32
    %c0_i32_0 = arith.constant 0 : i32
    %c0_i32_1 = arith.constant 0 : i32
    return %c0_i32, %c0_i32_0, %arg0 : i32, i32, i32
  }
  func.func @transform_2(%arg0: i32) -> (i32, i32) {
    %c0_i32 = arith.constant 0 : i32
    %c0_i32_0 = arith.constant 0 : i32
    return %c0_i32, %arg0 : i32, i32
  }
  func.func @transform_3(%arg0: i32) -> (i32, i32) {
    %c0_i32 = arith.constant 0 : i32
    %c0_i32_0 = arith.constant 0 : i32
    %c0_i32_1 = arith.constant 0 : i32
    return %c0_i32, %c0_i32_0 : i32, i32
  }
  func.func @transform_4(%arg0: i32) -> (i32, i32) {
    %c0_i32 = arith.constant 0 : i32
    %c0_i32_0 = arith.constant 0 : i32
    %c0_i32_1 = arith.constant 0 : i32
    return %c0_i32, %c0_i32_0 : i32, i32
  }
  func.func @transform_5(%arg0: i32) -> (i32, i32) {
    %c0_i32 = arith.constant 0 : i32
    %c0_i32_0 = arith.constant 0 : i32
    %c0_i32_1 = arith.constant 0 : i32
    return %c0_i32, %c0_i32_0 : i32, i32
  }
  func.func @transform_6(%arg0: i32) -> (i32, i32) {
    %c0_i32 = arith.constant 0 : i32
    %c0_i32_0 = arith.constant 0 : i32
    %c0_i32_1 = arith.constant 0 : i32
    return %c0_i32, %c0_i32_0 : i32, i32
  }
  func.func @transform_7(%arg0: i32) -> (i32, i32, i32, i32) {
    %c0_i32 = arith.constant 0 : i32
    %c0_i32_0 = arith.constant 0 : i32
    %c0_i32_1 = arith.constant 0 : i32
    %c0_i32_2 = arith.constant 0 : i32
    return %arg0, %c0_i32, %c0_i32_0, %c0_i32_1 : i32, i32, i32, i32
  }
}

</mosaic_0001>

<llo_original>
// kernel: tpu_custom_call.1
$region0: #{tpu_custom_call.1}
  #allocation0 [shape = 'u32[]', space=smem, size = 0x4, offset = 0x4, fixed_abs, tag = 'smem constant byte address 0x4 - core index']
  #allocation1 [shape = 'u32[144,128]{1,0:T(1,128)}', space=vmem, size = 0x12000, scoped, tag = 'internal scratch']
  %s0 = inlined_call_operand.vmem [shape: f32[2], index: 0, kind: input, shape index: {}]
  %s1 = inlined_call_operand.vmem [shape: f32[2,4,256], index: 1, kind: input, shape index: {}]
  %s2 = inlined_call_operand.vmem [shape: f32[4,256], index: 2, kind: input, shape index: {}]
  %s3 = inlined_call_operand.vmem [shape: bf16[32,4], index: 3, kind: input, shape index: {}]
  %s4 = inlined_call_operand.vmem [shape: f32[32,1], index: 4, kind: input, shape index: {}]
  %s5 = inlined_call_operand.vmem [shape: bf16[4,32], index: 5, kind: input, shape index: {}]
  %s6 = inlined_call_operand.vmem [shape: f32[4,1], index: 6, kind: input, shape index: {}]
  %s7 = inlined_call_operand.hbm [shape: f32[1,2,4,128], index: 7, kind: output, shape index: {}]
  %s8 = sld [smem:[#allocation0]]
  $region42: #{tpu_custom_call.1} parent=0
    _
  %s10 = ssub.s32 1, %s8
  %s11 = scalar_select 0, %s10, %s8
  $region1: #{tpu_custom_call.1} parent=0
    #allocation2 [shape = 'u8[512]{0}', space=smem, size = 0x200, scoped, tag = 'input window, operand 0, single buffered']
    #allocation3 [shape = 's32[1]{0}', space=sflag, size = 0x4, scoped, tag = 'scoped memory for tpu_custom_call.1']
    #allocation4 [shape = 's32[1]{0}', space=sflag, size = 0x4, scoped, tag = 'scoped memory for tpu_custom_call.1']
    #allocation5 [shape = 'u8[4096]{0}', space=vmem, size = 0x1000, scoped, tag = 'output window, operand 0, single buffered']
    %12 = vsyncpa [#allocation4], 0
    %13 = vsyncpa [#allocation3], 0
    // Predicated region
    $region2: #{tpu_custom_call.1} parent=1 // pred_check
      _
    $region3: #{tpu_custom_call.1} parent=1 // pred_check_branch
      %15 = sbr.rel (0) target = $region5
    $region4: #{tpu_custom_call.1} parent=1 // pred_region
      %s17 = ssub.s32 16, 16
      %18 = vsyncadd [#allocation4], %s17
      %s20 = sshll.u32 %s0, 4
      %s21 = int_to_ptr.vmem [resolvable:$true] %s20
      %23 = dma.vmem_to_smem %s21, 16, [#allocation2], [#allocation4]
    $region5: #{tpu_custom_call.1} parent=1 // pred_fallthru
      _
    // Predicated region
    $region6: #{tpu_custom_call.1} parent=1 // pred_check
      _
    $region7: #{tpu_custom_call.1} parent=1 // pred_check_branch
      %25 = sbr.rel (0) target = $region9
    $region8: #{tpu_custom_call.1} parent=1 // pred_region
      _
    $region9: #{tpu_custom_call.1} parent=1 // pred_fallthru
      _
    // Predicated region
    $region10: #{tpu_custom_call.1} parent=1 // pred_check
      _
    $region11: #{tpu_custom_call.1} parent=1 // pred_check_branch
      %27 = sbr.rel (0) target = $region13
    $region12: #{tpu_custom_call.1} parent=1 // pred_region
      _
    $region13: #{tpu_custom_call.1} parent=1 // pred_fallthru
      _
    // Predicated region
    $region14: #{tpu_custom_call.1} parent=1 // pred_check
      _
    $region15: #{tpu_custom_call.1} parent=1 // pred_check_branch
      %29 = sbr.rel (0) target = $region17
    $region16: #{tpu_custom_call.1} parent=1 // pred_region
      _
    $region17: #{tpu_custom_call.1} parent=1 // pred_fallthru
      _
    // Predicated region
    $region18: #{tpu_custom_call.1} parent=1 // pred_check
      _
    $region19: #{tpu_custom_call.1} parent=1 // pred_check_branch
      %31 = sbr.rel (0) target = $region21
    $region20: #{tpu_custom_call.1} parent=1 // pred_region
      _
    $region21: #{tpu_custom_call.1} parent=1 // pred_fallthru
      _
    // Predicated region
    $region22: #{tpu_custom_call.1} parent=1 // pred_check
      _
    $region23: #{tpu_custom_call.1} parent=1 // pred_check_branch
      %33 = sbr.rel (0) target = $region25
    $region24: #{tpu_custom_call.1} parent=1 // pred_region
      _
    $region25: #{tpu_custom_call.1} parent=1 // pred_fallthru
      _
    // Predicated region
    $region26: #{tpu_custom_call.1} parent=1 // pred_check
      _
    $region27: #{tpu_custom_call.1} parent=1 // pred_check_branch
      %35 = sbr.rel (0) target = $region29
    $region28: #{tpu_custom_call.1} parent=1 // pred_region
      _
    $region29: #{tpu_custom_call.1} parent=1 // pred_fallthru
      _
    // Predicated region
    $region30: #{tpu_custom_call.1} parent=1 // pred_check
      _
    $region31: #{tpu_custom_call.1} parent=1 // pred_check_branch
      %37 = sbr.rel (0) target = $region33
    $region32: #{tpu_custom_call.1} parent=1 // pred_region
      %38 = dma.done [#allocation4], 16
    $region33: #{tpu_custom_call.1} parent=1 // pred_fallthru
      _
    %39 = sfence
    %s41 = sld [smem:[#allocation2]]
    %s42 = sld [smem:[#allocation2 + $0x1]]
    %v43 = vld [vmem:[%s2] sm:$0xff]
    %v44 = vld [vmem:[%s1] sm:$0xff]
    %v45 = vld [vmem:[%s1 + $0x8] sm:$0xff]
    %v46 = vstv %s41
    %v47 = vmul.f32 %v46, %v44
    %v48 = vstv %s42
    %v49 = vmul.f32 %v48, %v43
    %v50 = vadd.f32 %v47, %v49
    %v51 = vld [vmem:[%s3] sm:$0xf]
    %v52 = vld [vmem:[%s3 + $0x4] sm:$0xf]
    %v53 = vld [vmem:[%s3 + $0x8] sm:$0xf]
    %v54 = vld [vmem:[%s3 + $0xc] sm:$0xf]
    %v56 = vcombine.high %v50, %v50
    %v58 = vpack.c.bf16 %v50, %v50
    %v59 = vpack.c.bf16 %v56, %v56
    %v60 = vld [vmem:[%s4] sm:$0xff]
    %v61 = vld [vmem:[%s4 + $0x8] sm:$0xff]
    %v62 = vld [vmem:[%s4 + $0x10] sm:$0xff]
    %v63 = vld [vmem:[%s4 + $0x18] sm:$0xff]
    %65 = vset.pattern.permute.xlu0 0
    %66 = vperm.xlu0 %65, %v60
    %v67 = vpop.permute.xlu0 %66
    %70 = vset.pattern.permute.xlu0 0
    %71 = vperm.xlu0 %70, %v61
    %v72 = vpop.permute.xlu0 %71
    %75 = vset.pattern.permute.xlu0 0
    %76 = vperm.xlu0 %75, %v62
    %v77 = vpop.permute.xlu0 %76
    %80 = vset.pattern.permute.xlu0 0
    %81 = vperm.xlu0 %80, %v63
    %v82 = vpop.permute.xlu0 %81
    %v88 = vunpack.c.l.b16 %v51
    %v89 = vunpack.c.l.b16 %v52
    %v90 = vunpack.c.l.b16 %v53
    %v91 = vunpack.c.l.b16 %v54
    %v92 = vpack.c.b16 %v89, %v88
    %v93 = vpack.c.b16 %v91, %v90
    %vm94 = vcmask 31744
    %v96 = vsel %vm94, %v92, 0
    %v99 = vsel %vm94, %v93, 0
    %vm101 = vcmask 1041408
    %v103 = vsel %vm101, %v58, 0
    %v106 = vsel %vm101, %v59, 0
    %108 = vmatprep.subr.bf16.mxu0 %v106
    %109 = vmatpush1.bf16.msra.mxu0 %v103
    %110 = vmatprep.subr.bf16.mxu0 0
    %111 = vmatpush1.bf16.msra.mxu0 0
    %112 = vmatprep.subr.bf16.mxu0 0
    %113 = vmatpush1.bf16.msra.mxu0 0
    %114 = vmatprep.subr.bf16.mxu0 0
    %115 = vmatpush1.bf16.msra.mxu0 0
    %116 = vmatprep.subr.bf16.mxu0 0
    %117 = vmatpush1.bf16.msra.mxu0 0
    %118 = vmatprep.subr.bf16.mxu0 0
    %119 = vmatpush1.bf16.msra.mxu0 0
    %120 = vmatprep.subr.bf16.mxu0 0
    %121 = vmatpush1.bf16.msra.mxu0 0
    %122 = vmatprep.subr.bf16.mxu0 0
    %123 = vmatpush1.bf16.msra.mxu0 0
    %124 = vmatprep.subr.bf16.mxu0 0
    %125 = vmatpush1.bf16.msra.mxu0 0
    %126 = vmatprep.subr.bf16.mxu0 0
    %127 = vmatpush1.bf16.msra.mxu0 0
    %128 = vmatprep.subr.bf16.mxu0 0
    %129 = vmatpush1.bf16.msra.mxu0 0
    %130 = vmatprep.subr.bf16.mxu0 0
    %131 = vmatpush1.bf16.msra.mxu0 0
    %132 = vmatprep.subr.bf16.mxu0 0
    %133 = vmatpush1.bf16.msra.mxu0 0
    %134 = vmatprep.subr.bf16.mxu0 0
    %135 = vmatpush1.bf16.msra.mxu0 0
    %136 = vmatprep.subr.bf16.mxu0 0
    %137 = vmatpush1.bf16.msra.mxu0 0
    %138 = vmatprep.subr.bf16.mxu0 0
    %139 = vmatpush1.bf16.msra.mxu0 0
    %140 = vmatprep.mubr.bf16.mxu0 0
    %141 = vmatmul.mubr.bf16.gmra.mrb[0].mxu0 %v96
    %v142 = vpop.f32.mrb[0].mxu0
    %v143 = vadd.f32 %v67, %v142
    %v144 = vpop.f32.mrb[0].mxu0
    %v145 = vadd.f32 %v67, %v144
    %v146 = vpop.f32.mrb[0].mxu0
    %v147 = vadd.f32 %v72, %v146
    %v148 = vpop.f32.mrb[0].mxu0
    %v149 = vadd.f32 %v72, %v148
    %150 = vmatprep.mubr.bf16.mxu0 0
    %151 = vmatmul.mubr.bf16.gmra.mrb[0].mxu0 %v99
    %v152 = vpop.f32.mrb[0].mxu0
    %v153 = vadd.f32 %v77, %v152
    %v154 = vpop.f32.mrb[0].mxu0
    %v155 = vadd.f32 %v77, %v154
    %v156 = vpop.f32.mrb[0].mxu0
    %v157 = vadd.f32 %v82, %v156
    %v158 = vpop.f32.mrb[0].mxu0
    %v159 = vadd.f32 %v82, %v158
    %160 = vdwg.mxu0
    %v161 = vmax.f32 %v143, 0.0
    %v162 = vmax.f32 %v145, 0.0
    %v163 = vmax.f32 %v147, 0.0
    %v164 = vmax.f32 %v149, 0.0
    %v165 = vmax.f32 %v153, 0.0
    %v166 = vmax.f32 %v155, 0.0
    %v167 = vmax.f32 %v157, 0.0
    %v168 = vmax.f32 %v159, 0.0
    %v169 = vld [vmem:[%s5] sm:$0x3]
    %v170 = vpack.c.bf16 %v163, %v161
    %v171 = vpack.c.bf16 %v164, %v162
    %v172 = vpack.c.bf16 %v167, %v165
    %v173 = vpack.c.bf16 %v168, %v166
    %v174 = vld [vmem:[%s6] sm:$0xf]
    %176 = vset.pattern.permute.xlu0 0
    %177 = vperm.xlu0 %176, %v174
    %v178 = vpop.permute.xlu0 %177
    %vm180 = vcmask 261120
    %v182 = vsel %vm180, %v169, 0
    %184 = vmatprep.subr.bf16.mxu0 %v171
    %185 = vmatpush1.bf16.msra.mxu0 %v170
    %186 = vmatprep.subr.bf16.mxu0 %v173
    %187 = vmatpush1.bf16.msra.mxu0 %v172
    %188 = vmatprep.subr.bf16.mxu0 0
    %189 = vmatpush1.bf16.msra.mxu0 0
    %190 = vmatprep.subr.bf16.mxu0 0
    %191 = vmatpush1.bf16.msra.mxu0 0
    %192 = vmatprep.subr.bf16.mxu0 0
    %193 = vmatpush1.bf16.msra.mxu0 0
    %194 = vmatprep.subr.bf16.mxu0 0
    %195 = vmatpush1.bf16.msra.mxu0 0
    %196 = vmatprep.subr.bf16.mxu0 0
    %197 = vmatpush1.bf16.msra.mxu0 0
    %198 = vmatprep.subr.bf16.mxu0 0
    %199 = vmatpush1.bf16.msra.mxu0 0
    %200 = vmatprep.subr.bf16.mxu0 0
    %201 = vmatpush1.bf16.msra.mxu0 0
    %202 = vmatprep.subr.bf16.mxu0 0
    %203 = vmatpush1.bf16.msra.mxu0 0
    %204 = vmatprep.subr.bf16.mxu0 0
    %205 = vmatpush1.bf16.msra.mxu0 0
    %206 = vmatprep.subr.bf16.mxu0 0
    %207 = vmatpush1.bf16.msra.mxu0 0
    %208 = vmatprep.subr.bf16.mxu0 0
    %209 = vmatpush1.bf16.msra.mxu0 0
    %210 = vmatprep.subr.bf16.mxu0 0
    %211 = vmatpush1.bf16.msra.mxu0 0
    %212 = vmatprep.subr.bf16.mxu0 0
    %213 = vmatpush1.bf16.msra.mxu0 0
    %214 = vmatprep.subr.bf16.mxu0 0
    %215 = vmatpush1.bf16.msra.mxu0 0
    %216 = vmatprep.mubr.bf16.mxu0 0
    %217 = vmatmul.mubr.bf16.gmra.mrb[0].mxu0 %v182
    %v218 = vpop.f32.mrb[0].mxu0
    %v219 = vadd.f32 %v178, %v218
    %v220 = vpop.f32.mrb[0].mxu0
    %v221 = vadd.f32 %v178, %v220
    %v222 = vpop.f32.mrb[0].mxu0
    %v223 = vpop.f32.mrb[0].mxu0
    %224 = vdwg.mxu0
    %v227 = vcombine.low %v219, %v221
    %v229 = vsub.f32 %v43, %v227
    %v230 = vand.u32 2147483647, %v229
    %v232 = vrot.slane %v230, 4
    %v234 = vadd.f32 %v230, %v232
    %235 = vst [vmem:[#allocation5] sm:$0xf] %v234
    %v236 = vmul.f32 %v46, %v45
    %v237 = vadd.f32 %v236, %v49
    %v238 = vld [vmem:[%s3] sm:$0xf]
    %v239 = vld [vmem:[%s3 + $0x4] sm:$0xf]
    %v240 = vld [vmem:[%s3 + $0x8] sm:$0xf]
    %v241 = vld [vmem:[%s3 + $0xc] sm:$0xf]
    %v243 = vcombine.high %v237, %v237
    %v245 = vpack.c.bf16 %v237, %v237
    %v246 = vpack.c.bf16 %v243, %v243
    %v247 = vld [vmem:[%s4] sm:$0xff]
    %v248 = vld [vmem:[%s4 + $0x8] sm:$0xff]
    %v249 = vld [vmem:[%s4 + $0x10] sm:$0xff]
    %v250 = vld [vmem:[%s4 + $0x18] sm:$0xff]
    %252 = vset.pattern.permute.xlu0 0
    %253 = vperm.xlu0 %252, %v247
    %v254 = vpop.permute.xlu0 %253
    %257 = vset.pattern.permute.xlu0 0
    %258 = vperm.xlu0 %257, %v248
    %v259 = vpop.permute.xlu0 %258
    %262 = vset.pattern.permute.xlu0 0
    %263 = vperm.xlu0 %262, %v249
    %v264 = vpop.permute.xlu0 %263
    %267 = vset.pattern.permute.xlu0 0
    %268 = vperm.xlu0 %267, %v250
    %v269 = vpop.permute.xlu0 %268
    %v275 = vunpack.c.l.b16 %v238
    %v276 = vunpack.c.l.b16 %v239
    %v277 = vunpack.c.l.b16 %v240
    %v278 = vunpack.c.l.b16 %v241
    %v279 = vpack.c.b16 %v276, %v275
    %v280 = vpack.c.b16 %v278, %v277
    %v282 = vsel %vm94, %v279, 0
    %v285 = vsel %vm94, %v280, 0
    %v288 = vsel %vm101, %v245, 0
    %v291 = vsel %vm101, %v246, 0
    %293 = vmatprep.subr.bf16.mxu0 %v291
    %294 = vmatpush1.bf16.msra.mxu0 %v288
    %295 = vmatprep.subr.bf16.mxu0 0
    %296 = vmatpush1.bf16.msra.mxu0 0
    %297 = vmatprep.subr.bf16.mxu0 0
    %298 = vmatpush1.bf16.msra.mxu0 0
    %299 = vmatprep.subr.bf16.mxu0 0
    %300 = vmatpush1.bf16.msra.mxu0 0
    %301 = vmatprep.subr.bf16.mxu0 0
    %302 = vmatpush1.bf16.msra.mxu0 0
    %303 = vmatprep.subr.bf16.mxu0 0
    %304 = vmatpush1.bf16.msra.mxu0 0
    %305 = vmatprep.subr.bf16.mxu0 0
    %306 = vmatpush1.bf16.msra.mxu0 0
    %307 = vmatprep.subr.bf16.mxu0 0
    %308 = vmatpush1.bf16.msra.mxu0 0
    %309 = vmatprep.subr.bf16.mxu0 0
    %310 = vmatpush1.bf16.msra.mxu0 0
    %311 = vmatprep.subr.bf16.mxu0 0
    %312 = vmatpush1.bf16.msra.mxu0 0
    %313 = vmatprep.subr.bf16.mxu0 0
    %314 = vmatpush1.bf16.msra.mxu0 0
    %315 = vmatprep.subr.bf16.mxu0 0
    %316 = vmatpush1.bf16.msra.mxu0 0
    %317 = vmatprep.subr.bf16.mxu0 0
    %318 = vmatpush1.bf16.msra.mxu0 0
    %319 = vmatprep.subr.bf16.mxu0 0
    %320 = vmatpush1.bf16.msra.mxu0 0
    %321 = vmatprep.subr.bf16.mxu0 0
    %322 = vmatpush1.bf16.msra.mxu0 0
    %323 = vmatprep.subr.bf16.mxu0 0
    %324 = vmatpush1.bf16.msra.mxu0 0
    %325 = vmatprep.mubr.bf16.mxu0 0
    %326 = vmatmul.mubr.bf16.gmra.mrb[0].mxu0 %v282
    %v327 = vpop.f32.mrb[0].mxu0
    %v328 = vadd.f32 %v254, %v327
    %v329 = vpop.f32.mrb[0].mxu0
    %v330 = vadd.f32 %v254, %v329
    %v331 = vpop.f32.mrb[0].mxu0
    %v332 = vadd.f32 %v259, %v331
    %v333 = vpop.f32.mrb[0].mxu0
    %v334 = vadd.f32 %v259, %v333
    %335 = vmatprep.mubr.bf16.mxu0 0
    %336 = vmatmul.mubr.bf16.gmra.mrb[0].mxu0 %v285
    %v337 = vpop.f32.mrb[0].mxu0
    %v338 = vadd.f32 %v264, %v337
    %v339 = vpop.f32.mrb[0].mxu0
    %v340 = vadd.f32 %v264, %v339
    %v341 = vpop.f32.mrb[0].mxu0
    %v342 = vadd.f32 %v269, %v341
    %v343 = vpop.f32.mrb[0].mxu0
    %v344 = vadd.f32 %v269, %v343
    %345 = vdwg.mxu0
    %v346 = vmax.f32 %v328, 0.0
    %v347 = vmax.f32 %v330, 0.0
    %v348 = vmax.f32 %v332, 0.0
    %v349 = vmax.f32 %v334, 0.0
    %v350 = vmax.f32 %v338, 0.0
    %v351 = vmax.f32 %v340, 0.0
    %v352 = vmax.f32 %v342, 0.0
    %v353 = vmax.f32 %v344, 0.0
    %v354 = vld [vmem:[%s5] sm:$0x3]
    %v355 = vpack.c.bf16 %v348, %v346
    %v356 = vpack.c.bf16 %v349, %v347
    %v357 = vpack.c.bf16 %v352, %v350
    %v358 = vpack.c.bf16 %v353, %v351
    %v359 = vld [vmem:[%s6] sm:$0xf]
    %361 = vset.pattern.permute.xlu0 0
    %362 = vperm.xlu0 %361, %v359
    %v363 = vpop.permute.xlu0 %362
    %v366 = vsel %vm180, %v354, 0
    %368 = vmatprep.subr.bf16.mxu0 %v356
    %369 = vmatpush1.bf16.msra.mxu0 %v355
    %370 = vmatprep.subr.bf16.mxu0 %v358
    %371 = vmatpush1.bf16.msra.mxu0 %v357
    %372 = vmatprep.subr.bf16.mxu0 0
    %373 = vmatpush1.bf16.msra.mxu0 0
    %374 = vmatprep.subr.bf16.mxu0 0
    %375 = vmatpush1.bf16.msra.mxu0 0
    %376 = vmatprep.subr.bf16.mxu0 0
    %377 = vmatpush1.bf16.msra.mxu0 0
    %378 = vmatprep.subr.bf16.mxu0 0
    %379 = vmatpush1.bf16.msra.mxu0 0
    %380 = vmatprep.subr.bf16.mxu0 0
    %381 = vmatpush1.bf16.msra.mxu0 0
    %382 = vmatprep.subr.bf16.mxu0 0
    %383 = vmatpush1.bf16.msra.mxu0 0
    %384 = vmatprep.subr.bf16.mxu0 0
    %385 = vmatpush1.bf16.msra.mxu0 0
    %386 = vmatprep.subr.bf16.mxu0 0
    %387 = vmatpush1.bf16.msra.mxu0 0
    %388 = vmatprep.subr.bf16.mxu0 0
    %389 = vmatpush1.bf16.msra.mxu0 0
    %390 = vmatprep.subr.bf16.mxu0 0
    %391 = vmatpush1.bf16.msra.mxu0 0
    %392 = vmatprep.subr.bf16.mxu0 0
    %393 = vmatpush1.bf16.msra.mxu0 0
    %394 = vmatprep.subr.bf16.mxu0 0
    %395 = vmatpush1.bf16.msra.mxu0 0
    %396 = vmatprep.subr.bf16.mxu0 0
    %397 = vmatpush1.bf16.msra.mxu0 0
    %398 = vmatprep.subr.bf16.mxu0 0
    %399 = vmatpush1.bf16.msra.mxu0 0
    %400 = vmatprep.mubr.bf16.mxu0 0
    %401 = vmatmul.mubr.bf16.gmra.mrb[0].mxu0 %v366
    %v402 = vpop.f32.mrb[0].mxu0
    %v403 = vadd.f32 %v363, %v402
    %v404 = vpop.f32.mrb[0].mxu0
    %v405 = vadd.f32 %v363, %v404
    %v406 = vpop.f32.mrb[0].mxu0
    %v407 = vpop.f32.mrb[0].mxu0
    %408 = vdwg.mxu0
    %v411 = vcombine.low %v403, %v405
    %v413 = vsub.f32 %v43, %v411
    %v414 = vand.u32 2147483647, %v413
    %v416 = vrot.slane %v414, 4
    %v418 = vadd.f32 %v414, %v416
    %s419 = scalar_lea.vmem [#allocation5], 4
    %420 = vst [vmem:[%s419] sm:$0xf] %v418
    // Predicated region
    $region34: #{tpu_custom_call.1} parent=1 // pred_check
      _
    $region35: #{tpu_custom_call.1} parent=1 // pred_check_branch
      %422 = sbr.rel (0) target = $region37
    $region36: #{tpu_custom_call.1} parent=1 // pred_region
      %s424 = ssub.s32 128, 128
      %425 = vsyncadd [#allocation3], %s424
      %s426 = sshll.u32 [#allocation5], 4
      %s427 = int_to_ptr.vmem [resolvable:$true] %s426
      %432 = dma.vmem_to_hbm [thread:$0]  %s427, 128, %s7, [#allocation3], 64, 64, 4
    $region37: #{tpu_custom_call.1} parent=1 // pred_fallthru
      _
    // Predicated region
    $region38: #{tpu_custom_call.1} parent=1 // pred_check
      _
    $region39: #{tpu_custom_call.1} parent=1 // pred_check_branch
      %434 = sbr.rel (0) target = $region41
    $region40: #{tpu_custom_call.1} parent=1 // pred_region
      %435 = dma.done [#allocation3], 128
    $region41: #{tpu_custom_call.1} parent=1 // pred_fallthru
      _
    %436 = vsyncpa [#allocation3], 1
    %437 = vsyncpa [#allocation4], 1

</llo_original>
